<compile_context>
chip_gen: v6e
topology: v6e:2x2x1
jax: 0.10.0
libtpu: 0.0.40
codegen_flags: <defaults>
</compile_context>

<pallas_src>
import jax
import jax.numpy as jnp
from jax.experimental import pallas as pl
from jax.experimental.pallas import tpu as pltpu

_LANES = 128
_DEFAULT_TILE_ROWS = 2048  # 2048*128*4B = 1 MiB per block

# pl.reciprocal has no CPU/interpret lowering; only use it on a real TPU.
_ON_TPU = jax.default_backend() == "tpu"


def _recip(x):
    """1/x.  Approx EUP reciprocal on TPU (free slot, ~2^-12 rel err is
    irrelevant for noise); exact divide elsewhere."""
    if _ON_TPU:
        return pl.reciprocal(x, approx=True)
    return 1.0 / x


def _shr(x, k):
    """Logical right shift of int32 bit patterns by a static amount k."""
    return (x >> k) & ((1 << (32 - k)) - 1)


def _hash_bits(idx, seed):
    """lowbias32-style avalanche hash of (seed, element index) -> 32 bits.

    All arithmetic is wrapping int32 (bit-identical to uint32), so it lowers
    on both Mosaic TPU and the CPU interpreter.
    """
    x = idx ^ (seed * jnp.int32(-1640531527))   # 0x9E3779B9 (golden ratio)
    x = x ^ _shr(x, 16)
    x = x * jnp.int32(0x7FEB352D)
    x = x ^ _shr(x, 15)
    x = x * jnp.int32(-2073254261)              # 0x846CA68B
    x = x ^ _shr(x, 16)
    return x


def _uniform_open01(bits):
    """Map 32 hash bits to f32 uniforms strictly inside (0, 1)."""
    k = _shr(bits, 9).astype(jnp.float32)       # top 23 bits, in [0, 2^23)
    # (k + 0.5) * 2^-23 is exact in f32 and never hits 0.0 or 1.0.
    return (k + 0.5) * (1.0 / (1 << 23))


def _std_normal(u):
    """Branchless inverse normal CDF (Acklam's approximation)."""
    a0, a1, a2, a3, a4, a5 = (-3.969683028665376e+01, 2.209460984245205e+02,
                              -2.759285104469687e+02, 1.383577518672690e+02,
                              -3.066479806614716e+01, 2.506628277459239e+00)
    b0, b1, b2, b3, b4 = (-5.447609879822406e+01, 1.615858368580409e+02,
                          -1.556989798598866e+02, 6.680131188771972e+01,
                          -1.328068155288572e+01)
    c0, c1, c2, c3, c4, c5 = (-7.784894002430293e-03, -3.223964580411365e-01,
                              -2.400758277161838e+00, -2.549732539343734e+00,
                              4.374664141464968e+00, 2.938163982698783e+00)
    d0, d1, d2, d3 = (7.784695709041462e-03, 3.224671290700398e-01,
                      2.445134137142996e+00, 3.754408661907416e+00)
    p_low = 0.02425

    # Central region: |u - 0.5| <= 0.5 - p_low
    q = u - 0.5
    r = q * q
    num_c = (((((a0 * r + a1) * r + a2) * r + a3) * r + a4) * r + a5) * q
    den_c = ((((b0 * r + b1) * r + b2) * r + b3) * r + b4) * r + 1.0
    x_c = num_c * _recip(den_c)

    # Tails: evaluate on min(u, 1-u) in (0, 0.5], flip sign for the upper tail.
    # Ratio computed exactly once (hoisted), then sign-selected.
    ut = jnp.minimum(u, 1.0 - u)
    t = jnp.sqrt(-2.0 * jnp.log(ut))
    num_t = ((((c0 * t + c1) * t + c2) * t + c3) * t + c4) * t + c5
    den_t = (((d0 * t + d1) * t + d2) * t + d3) * t + 1.0
    ratio_t = num_t * _recip(den_t)
    x_t = jnp.where(u > 0.5, -ratio_t, ratio_t)

    return jnp.where(jnp.abs(q) <= (0.5 - p_low), x_c, x_t)


def _inject_noise_kernel(seed_ref, x_ref, o_ref):
    rows_b, lanes = x_ref.shape
    pid = pl.program_id(0)
    # Global flat element index of every slot in this tile -> noise is
    # independent of the tiling and fully determined by (seed, element).
    row = jax.lax.broadcasted_iota(jnp.int32, (rows_b, lanes), 0)
    lane = jax.lax.broadcasted_iota(jnp.int32, (rows_b, lanes), 1)
    idx = (pid * rows_b + row) * lanes + lane

    n = _std_normal(_uniform_open01(_hash_bits(idx, seed_ref[0])))
    x = x_ref[...].astype(jnp.float32)
    # x*(1+n1)+n2  ==(in distribution)==  x + sqrt(x^2+1)*n  (one draw, not two)
    o_ref[...] = (x + jnp.sqrt(x * x + 1.0) * n).astype(o_ref.dtype)


def inject_noises(x, seed, *, is_injecting=True, tile_rows=_DEFAULT_TILE_ROWS):
    """Pallas equivalent of InjectNoises(is_injecting).forward(x)."""
    if not is_injecting or x.size == 0:
        return x  # identity path -- metadata only, no kernel

    orig_shape = x.shape
    n = x.size
    rows = pl.cdiv(n, _LANES)

    # Lane-alignment padding only (<= 127 elements); zero for the common
    # NCHW sizes, so no extra HBM pass in the usual case.
    pad = rows * _LANES - n
    flat = x.reshape(-1)
    if pad:
        flat = jnp.pad(flat, (0, pad))
    x2d = flat.reshape(rows, _LANES)

    if rows <= tile_rows:
        tile = rows                         # block == full dim: always legal
    else:
        tile = max(8, (tile_rows // 8) * 8)  # sublane-aligned; edge block masked
    grid = (pl.cdiv(rows, tile),)

    seed_arr = jnp.asarray(seed, dtype=jnp.int32).reshape((1,))

    out2d = pl.pallas_call(
        _inject_noise_kernel,
        out_shape=jax.ShapeDtypeStruct((rows, _LANES), x.dtype),
        grid_spec=pltpu.PrefetchScalarGridSpec(
            num_scalar_prefetch=1,
            grid=grid,
            in_specs=[pl.BlockSpec((tile, _LANES), lambda i, s: (i, 0))],
            out_specs=pl.BlockSpec((tile, _LANES), lambda i, s: (i, 0)),
        ),
        compiler_params=pltpu.CompilerParams(
            # Iterations are fully independent.  On v7x, pltpu.CORE_PARALLEL on
            # this axis can be used to force 2-TensorCore sharding.
            dimension_semantics=("parallel",),
        ),
    )(seed_arr, x2d)

    out = out2d.reshape(-1)
    if pad:
        out = out[:n]
    return out.reshape(orig_shape)


if __name__ == "__main__":
    key = jax.random.PRNGKey(0)
    k1, k2, k3 = jax.random.split(key, 3)

    # Small NCHW input matching the module's typical use.
    x = jax.random.normal(k1, (2, 4, 16, 16), dtype=jnp.float32)
    out = jax.block_until_ready(inject_noises(x, seed=42, is_injecting=True))
    assert out.shape == x.shape and out.dtype == x.dtype, (out.shape, out.dtype)
    assert bool(jnp.all(jnp.isfinite(out)))
    assert not bool(jnp.array_equal(out, x))          # noise really was injected

    # is_injecting=False must be the identity (no kernel launched).
    same = inject_noises(x, seed=42, is_injecting=False)
    assert bool(jnp.array_equal(same, x))

    # Multi-step grid (small tile -> 4 grid steps) + distribution sanity check:
    # z = (out - x) / sqrt(x^2 + 1) should be ~ N(0, 1).
    x2 = jax.random.normal(k2, (4, 8, 64, 64), dtype=jnp.float32)
    out2 = jax.block_until_ready(inject_noises(x2, seed=7, tile_rows=256))
    z = (out2 - x2) / jnp.sqrt(x2 * x2 + 1.0)
    m, v = float(jnp.mean(z)), float(jnp.var(z))
    assert abs(m) < 0.1, m
    assert 0.85 < v < 1.15, v

    # Different seeds must give different noise.
    out2b = inject_noises(x2, seed=8, tile_rows=256)
    assert not bool(jnp.array_equal(out2, out2b))

    # Ragged shape: exercises the (<=127-element) lane-padding path.
    x3 = jax.random.normal(k3, (2, 3, 5, 7), dtype=jnp.float32)
    out3 = jax.block_until_ready(inject_noises(x3, seed=3))
    assert out3.shape == x3.shape and bool(jnp.all(jnp.isfinite(out3)))

    print("KERNEL_OK")
</pallas_src>

<mosaic_0001>
module attributes {stable_mosaic.version = 11 : i64} {
  func.func @_inject_noise_kernel(%arg0: i32, %arg1: memref<1xi32, #tpu.memory_space<smem>>, %arg2: memref<16x128xf32, #tpu.memory_space<vmem>>, %arg3: memref<16x128xf32, #tpu.memory_space<vmem>>) attributes {dimension_semantics = [#tpu.dimension_semantics<parallel>], iteration_bounds = array<i64: 1>, scalar_prefetch = 1 : i64, scratch_operands = 0 : i64, tpu.core_type = #tpu.core_type<tc>, window_params = [{transform_indices = @transform_0, window_bounds = array<i64: 16, 128>}, {transform_indices = @transform_1, window_bounds = array<i64: 16, 128>}]} {
    %0 = tpu.iota {dimensions = array<i32: 0>} : vector<16x128xi32>
    %1 = tpu.iota {dimensions = array<i32: 1>} : vector<16x128xi32>
    %c16_i32 = arith.constant 16 : i32
    %2 = arith.muli %arg0, %c16_i32 : i32
    %3 = vector.broadcast %2 : i32 to vector<16x128xi32>
    %4 = arith.addi %3, %0 : vector<16x128xi32>
    %c128_i32 = arith.constant 128 : i32
    %5 = vector.broadcast %c128_i32 : i32 to vector<16x128xi32>
    %6 = arith.muli %4, %5 : vector<16x128xi32>
    %7 = arith.addi %6, %1 : vector<16x128xi32>
    %c0 = arith.constant 0 : index
    %8 = memref.load %arg1[%c0] : memref<1xi32, #tpu.memory_space<smem>>
    %c-1640531527_i32 = arith.constant -1640531527 : i32
    %9 = arith.muli %8, %c-1640531527_i32 : i32
    %10 = vector.broadcast %9 : i32 to vector<16x128xi32>
    %11 = arith.xori %7, %10 : vector<16x128xi32>
    %c16_i32_0 = arith.constant 16 : i32
    %12 = vector.broadcast %c16_i32_0 : i32 to vector<16x128xi32>
    %13 = arith.shrsi %11, %12 : vector<16x128xi32>
    %c65535_i32 = arith.constant 65535 : i32
    %14 = vector.broadcast %c65535_i32 : i32 to vector<16x128xi32>
    %15 = arith.andi %13, %14 : vector<16x128xi32>
    %16 = arith.xori %11, %15 : vector<16x128xi32>
    %c2146121005_i32 = arith.constant 2146121005 : i32
    %17 = vector.broadcast %c2146121005_i32 : i32 to vector<16x128xi32>
    %18 = arith.muli %16, %17 : vector<16x128xi32>
    %c15_i32 = arith.constant 15 : i32
    %19 = vector.broadcast %c15_i32 : i32 to vector<16x128xi32>
    %20 = arith.shrsi %18, %19 : vector<16x128xi32>
    %c131071_i32 = arith.constant 131071 : i32
    %21 = vector.broadcast %c131071_i32 : i32 to vector<16x128xi32>
    %22 = arith.andi %20, %21 : vector<16x128xi32>
    %23 = arith.xori %18, %22 : vector<16x128xi32>
    %c-2073254261_i32 = arith.constant -2073254261 : i32
    %24 = vector.broadcast %c-2073254261_i32 : i32 to vector<16x128xi32>
    %25 = arith.muli %23, %24 : vector<16x128xi32>
    %c16_i32_1 = arith.constant 16 : i32
    %26 = vector.broadcast %c16_i32_1 : i32 to vector<16x128xi32>
    %27 = arith.shrsi %25, %26 : vector<16x128xi32>
    %c65535_i32_2 = arith.constant 65535 : i32
    %28 = vector.broadcast %c65535_i32_2 : i32 to vector<16x128xi32>
    %29 = arith.andi %27, %28 : vector<16x128xi32>
    %30 = arith.xori %25, %29 : vector<16x128xi32>
    %c9_i32 = arith.constant 9 : i32
    %31 = vector.broadcast %c9_i32 : i32 to vector<16x128xi32>
    %32 = arith.shrsi %30, %31 : vector<16x128xi32>
    %c8388607_i32 = arith.constant 8388607 : i32
    %33 = vector.broadcast %c8388607_i32 : i32 to vector<16x128xi32>
    %34 = arith.andi %32, %33 : vector<16x128xi32>
    %35 = arith.sitofp %34 : vector<16x128xi32> to vector<16x128xf32>
    %cst = arith.constant 5.000000e-01 : f32
    %36 = vector.broadcast %cst : f32 to vector<16x128xf32>
    %37 = arith.addf %35, %36 : vector<16x128xf32>
    %cst_3 = arith.constant 1.1920929E-7 : f32
    %38 = vector.broadcast %cst_3 : f32 to vector<16x128xf32>
    %39 = arith.mulf %37, %38 : vector<16x128xf32>
    %cst_4 = arith.constant 5.000000e-01 : f32
    %40 = vector.broadcast %cst_4 : f32 to vector<16x128xf32>
    %41 = arith.subf %39, %40 : vector<16x128xf32>
    %42 = arith.mulf %41, %41 : vector<16x128xf32>
    %cst_5 = arith.constant -39.6968307 : f32
    %43 = vector.broadcast %cst_5 : f32 to vector<16x128xf32>
    %44 = arith.mulf %43, %42 : vector<16x128xf32>
    %cst_6 = arith.constant 220.946106 : f32
    %45 = vector.broadcast %cst_6 : f32 to vector<16x128xf32>
    %46 = arith.addf %44, %45 : vector<16x128xf32>
    %47 = arith.mulf %46, %42 : vector<16x128xf32>
    %cst_7 = arith.constant -275.928497 : f32
    %48 = vector.broadcast %cst_7 : f32 to vector<16x128xf32>
    %49 = arith.addf %47, %48 : vector<16x128xf32>
    %50 = arith.mulf %49, %42 : vector<16x128xf32>
    %cst_8 = arith.constant 138.357758 : f32
    %51 = vector.broadcast %cst_8 : f32 to vector<16x128xf32>
    %52 = arith.addf %50, %51 : vector<16x128xf32>
    %53 = arith.mulf %52, %42 : vector<16x128xf32>
    %cst_9 = arith.constant -30.6647987 : f32
    %54 = vector.broadcast %cst_9 : f32 to vector<16x128xf32>
    %55 = arith.addf %53, %54 : vector<16x128xf32>
    %56 = arith.mulf %55, %42 : vector<16x128xf32>
    %cst_10 = arith.constant 2.50662827 : f32
    %57 = vector.broadcast %cst_10 : f32 to vector<16x128xf32>
    %58 = arith.addf %56, %57 : vector<16x128xf32>
    %59 = arith.mulf %58, %41 : vector<16x128xf32>
    %cst_11 = arith.constant -54.4760971 : f32
    %60 = vector.broadcast %cst_11 : f32 to vector<16x128xf32>
    %61 = arith.mulf %60, %42 : vector<16x128xf32>
    %cst_12 = arith.constant 161.585831 : f32
    %62 = vector.broadcast %cst_12 : f32 to vector<16x128xf32>
    %63 = arith.addf %61, %62 : vector<16x128xf32>
    %64 = arith.mulf %63, %42 : vector<16x128xf32>
    %cst_13 = arith.constant -155.698975 : f32
    %65 = vector.broadcast %cst_13 : f32 to vector<16x128xf32>
    %66 = arith.addf %64, %65 : vector<16x128xf32>
    %67 = arith.mulf %66, %42 : vector<16x128xf32>
    %cst_14 = arith.constant 66.8013153 : f32
    %68 = vector.broadcast %cst_14 : f32 to vector<16x128xf32>
    %69 = arith.addf %67, %68 : vector<16x128xf32>
    %70 = arith.mulf %69, %42 : vector<16x128xf32>
    %cst_15 = arith.constant -13.2806816 : f32
    %71 = vector.broadcast %cst_15 : f32 to vector<16x128xf32>
    %72 = arith.addf %70, %71 : vector<16x128xf32>
    %73 = arith.mulf %72, %42 : vector<16x128xf32>
    %cst_16 = arith.constant 1.000000e+00 : f32
    %74 = vector.broadcast %cst_16 : f32 to vector<16x128xf32>
    %75 = arith.addf %73, %74 : vector<16x128xf32>
    %cst_17 = arith.constant 1.000000e+00 : f32
    %76 = vector.broadcast %cst_17 : f32 to vector<16x128xf32>
    %77 = arith.divf %76, %75 : vector<16x128xf32>
    %78 = arith.mulf %59, %77 : vector<16x128xf32>
    %cst_18 = arith.constant 1.000000e+00 : f32
    %79 = vector.broadcast %cst_18 : f32 to vector<16x128xf32>
    %80 = arith.subf %79, %39 : vector<16x128xf32>
    %81 = arith.minimumf %39, %80 : vector<16x128xf32>
    %82 = math.log %81 : vector<16x128xf32>
    %cst_19 = arith.constant -2.000000e+00 : f32
    %83 = vector.broadcast %cst_19 : f32 to vector<16x128xf32>
    %84 = arith.mulf %83, %82 : vector<16x128xf32>
    %85 = math.sqrt %84 : vector<16x128xf32>
    %cst_20 = arith.constant -0.0077848942 : f32
    %86 = vector.broadcast %cst_20 : f32 to vector<16x128xf32>
    %87 = arith.mulf %86, %85 : vector<16x128xf32>
    %cst_21 = arith.constant -0.322396457 : f32
    %88 = vector.broadcast %cst_21 : f32 to vector<16x128xf32>
    %89 = arith.addf %87, %88 : vector<16x128xf32>
    %90 = arith.mulf %89, %85 : vector<16x128xf32>
    %cst_22 = arith.constant -2.40075827 : f32
    %91 = vector.broadcast %cst_22 : f32 to vector<16x128xf32>
    %92 = arith.addf %90, %91 : vector<16x128xf32>
    %93 = arith.mulf %92, %85 : vector<16x128xf32>
    %cst_23 = arith.constant -2.54973245 : f32
    %94 = vector.broadcast %cst_23 : f32 to vector<16x128xf32>
    %95 = arith.addf %93, %94 : vector<16x128xf32>
    %96 = arith.mulf %95, %85 : vector<16x128xf32>
    %cst_24 = arith.constant 4.37466431 : f32
    %97 = vector.broadcast %cst_24 : f32 to vector<16x128xf32>
    %98 = arith.addf %96, %97 : vector<16x128xf32>
    %99 = arith.mulf %98, %85 : vector<16x128xf32>
    %cst_25 = arith.constant 2.938164 : f32
    %100 = vector.broadcast %cst_25 : f32 to vector<16x128xf32>
    %101 = arith.addf %99, %100 : vector<16x128xf32>
    %cst_26 = arith.constant 0.00778469583 : f32
    %102 = vector.broadcast %cst_26 : f32 to vector<16x128xf32>
    %103 = arith.mulf %102, %85 : vector<16x128xf32>
    %cst_27 = arith.constant 0.322467119 : f32
    %104 = vector.broadcast %cst_27 : f32 to vector<16x128xf32>
    %105 = arith.addf %103, %104 : vector<16x128xf32>
    %106 = arith.mulf %105, %85 : vector<16x128xf32>
    %cst_28 = arith.constant 2.44513416 : f32
    %107 = vector.broadcast %cst_28 : f32 to vector<16x128xf32>
    %108 = arith.addf %106, %107 : vector<16x128xf32>
    %109 = arith.mulf %108, %85 : vector<16x128xf32>
    %cst_29 = arith.constant 3.7544086 : f32
    %110 = vector.broadcast %cst_29 : f32 to vector<16x128xf32>
    %111 = arith.addf %109, %110 : vector<16x128xf32>
    %112 = arith.mulf %111, %85 : vector<16x128xf32>
    %cst_30 = arith.constant 1.000000e+00 : f32
    %113 = vector.broadcast %cst_30 : f32 to vector<16x128xf32>
    %114 = arith.addf %112, %113 : vector<16x128xf32>
    %cst_31 = arith.constant 1.000000e+00 : f32
    %115 = vector.broadcast %cst_31 : f32 to vector<16x128xf32>
    %116 = arith.divf %115, %114 : vector<16x128xf32>
    %117 = arith.mulf %101, %116 : vector<16x128xf32>
    %cst_32 = arith.constant 5.000000e-01 : f32
    %118 = vector.broadcast %cst_32 : f32 to vector<16x128xf32>
    %119 = arith.cmpf ogt, %39, %118 : vector<16x128xf32>
    %cst_33 = arith.constant 0.000000e+00 : f32
    %120 = vector.broadcast %cst_33 : f32 to vector<16x128xf32>
    %121 = arith.subf %120, %117 : vector<16x128xf32>
    %122 = arith.select %119, %121, %117 : vector<16x128xi1>, vector<16x128xf32>
    %123 = math.absf %41 : vector<16x128xf32>
    %cst_34 = arith.constant 4.757500e-01 : f32
    %124 = vector.broadcast %cst_34 : f32 to vector<16x128xf32>
    %125 = arith.cmpf ole, %123, %124 : vector<16x128xf32>
    %126 = arith.select %125, %78, %122 : vector<16x128xi1>, vector<16x128xf32>
    %c0_35 = arith.constant 0 : index
    %c0_36 = arith.constant 0 : index
    %127 = vector.load %arg2[%c0_35, %c0_36] : memref<16x128xf32, #tpu.memory_space<vmem>>, vector<16x128xf32>
    %128 = arith.mulf %127, %127 : vector<16x128xf32>
    %cst_37 = arith.constant 1.000000e+00 : f32
    %129 = vector.broadcast %cst_37 : f32 to vector<16x128xf32>
    %130 = arith.addf %128, %129 : vector<16x128xf32>
    %131 = math.sqrt %130 : vector<16x128xf32>
    %132 = arith.mulf %131, %126 : vector<16x128xf32>
    %133 = arith.addf %127, %132 : vector<16x128xf32>
    %c0_38 = arith.constant 0 : index
    %c0_39 = arith.constant 0 : index
    %134 = vector.load %arg3[%c0_38, %c0_39] : memref<16x128xf32, #tpu.memory_space<vmem>>, vector<16x128xf32>
    tpu.vector_store %arg3[%c0_38, %c0_39], %133 {strides = array<i32>} : memref<16x128xf32, #tpu.memory_space<vmem>>, vector<16x128xf32>,
    return
  }
  func.func @transform_0(%arg0: i32, %arg1: memref<1xi32, #tpu.memory_space<smem>>) -> (i32, i32) {
    %c0_i32 = arith.constant 0 : i32
    %c0_i32_0 = arith.constant 0 : i32
    return %arg0, %c0_i32 : i32, i32
  }
  func.func @transform_1(%arg0: i32, %arg1: memref<1xi32, #tpu.memory_space<smem>>) -> (i32, i32) {
    %c0_i32 = arith.constant 0 : i32
    %c0_i32_0 = arith.constant 0 : i32
    return %arg0, %c0_i32 : i32, i32
  }
}

</mosaic_0001>

<llo_original>
// kernel: tpu_custom_call.1
$region0: #{tpu_custom_call.1}
  #allocation0 [shape = 'u32[]', space=smem, size = 0x4, offset = 0x4, fixed_abs, tag = 'smem constant byte address 0x4 - core index']
  #allocation1 [shape = 'u32[144,128]{1,0:T(1,128)}', space=vmem, size = 0x12000, scoped, tag = 'internal scratch']
  #allocation2 [shape = 's32[1]{0}', space=sflag, size = 0x4, scoped, tag = 'scoped memory for tpu_custom_call.1']
  #allocation3 [shape = 's32[1]{0:T(128)S(6)}', space=smem, size = 0x200, scoped, tag = 'prefetched SMEM operand 0']
  %s0 = inlined_call_operand.<no memory space> [shape: s32[1], index: 0, kind: input, shape index: {}]
  %s1 = inlined_call_operand.hbm [shape: f32[16,128], index: 1, kind: input, shape index: {}]
  %s2 = inlined_call_operand.hbm [shape: f32[16,128], index: 2, kind: output, shape index: {}]
  %s3 = sld [smem:[#allocation0]]
  $region18: #{tpu_custom_call.1} parent=0
    _
  %s5 = ssub.s32 1, %s3
  %s6 = scalar_select 0, %s5, %s3
  %7 = sst [smem:[#allocation3]] %s0
  $region1: #{tpu_custom_call.1} parent=0
    #allocation4 [shape = 'u8[8192]{0}', space=vmem, size = 0x2000, scoped, tag = 'input window, operand 1, single buffered']
    #allocation5 [shape = 's32[1]{0}', space=sflag, size = 0x4, scoped, tag = 'scoped memory for tpu_custom_call.1']
    #allocation6 [shape = 's32[1]{0}', space=sflag, size = 0x4, scoped, tag = 'scoped memory for tpu_custom_call.1']
    #allocation7 [shape = 'u8[8192]{0}', space=vmem, size = 0x2000, scoped, tag = 'output window, operand 0, single buffered']
    %8 = vsyncpa [#allocation5], 0
    %9 = vsyncpa [#allocation6], 0
    // Predicated region
    $region2: #{tpu_custom_call.1} parent=1 // pred_check
      _
    $region3: #{tpu_custom_call.1} parent=1 // pred_check_branch
      %11 = sbr.rel (0) target = $region5
    $region4: #{tpu_custom_call.1} parent=1 // pred_region
      %s13 = ssub.s32 256, 256
      %14 = vsyncadd [#allocation5], %s13
      %s15 = sshll.u32 [#allocation4], 4
      %s16 = int_to_ptr.vmem [resolvable:$true] %s15
      %21 = dma.hbm_to_vmem [thread:$0]  %s1, 256, %s16, [#allocation5], 128, 128, 8
    $region5: #{tpu_custom_call.1} parent=1 // pred_fallthru
      _
    // Predicated region
    $region6: #{tpu_custom_call.1} parent=1 // pred_check
      _
    $region7: #{tpu_custom_call.1} parent=1 // pred_check_branch
      %23 = sbr.rel (0) target = $region9
    $region8: #{tpu_custom_call.1} parent=1 // pred_region
      %24 = dma.done [#allocation5], 256
    $region9: #{tpu_custom_call.1} parent=1 // pred_fallthru
      _
    %v25 = vlaneseq
    %v26 = vshrl.u32 %v25, 7
    %v27 = vadd.s32 %v26, 8
    %v28 = vlaneseq
    %v29 = vand.u32 %v28, 127
    %s30 = smul.u32 0, 16
    %v31 = vstv %s30
    %v32 = vadd.s32 %v31, %v26
    %v33 = vadd.s32 %v31, %v27
    %v34 = vmul.u32 %v32, 128
    %v35 = vmul.u32 %v33, 128
    %v36 = vadd.s32 %v34, %v29
    %v37 = vadd.s32 %v35, %v29
    %s38 = sld [smem:[#allocation3]]
    %s39 = smul.u32 %s38, 2654435769
    %v40 = vstv %s39
    %v41 = vxor.u32 %v36, %v40
    %v42 = vxor.u32 %v37, %v40
    %v43 = vshra.s32 %v41, 16
    %v44 = vshra.s32 %v42, 16
    %v45 = vand.u32 %v43, 65535
    %v46 = vand.u32 %v44, 65535
    %v47 = vxor.u32 %v41, %v45
    %v48 = vxor.u32 %v42, %v46
    %v49 = vmul.u32 %v47, 2146121005
    %v50 = vmul.u32 %v48, 2146121005
    %v51 = vshra.s32 %v49, 15
    %v52 = vshra.s32 %v50, 15
    %v53 = vand.u32 %v51, 131071
    %v54 = vand.u32 %v52, 131071
    %v55 = vxor.u32 %v49, %v53
    %v56 = vxor.u32 %v50, %v54
    %v57 = vmul.u32 %v55, 2221713035
    %v58 = vmul.u32 %v56, 2221713035
    %v59 = vshra.s32 %v57, 16
    %v60 = vshra.s32 %v58, 16
    %v61 = vand.u32 %v59, 65535
    %v62 = vand.u32 %v60, 65535
    %v63 = vxor.u32 %v57, %v61
    %v64 = vxor.u32 %v58, %v62
    %v65 = vshra.s32 %v63, 9
    %v66 = vshra.s32 %v64, 9
    %v67 = vand.u32 %v65, 8388607
    %v68 = vand.u32 %v66, 8388607
    %v69 = vcvt.s32.f32 %v67
    %v70 = vcvt.s32.f32 %v68
    %v71 = vadd.f32 %v69, 0.5
    %v72 = vadd.f32 %v70, 0.5
    %v73 = vmul.f32 %v71, 1.1920929e-07
    %v74 = vmul.f32 %v72, 1.1920929e-07
    %v75 = vsub.f32 %v73, 0.5
    %v76 = vsub.f32 %v74, 0.5
    %v77 = vmul.f32 %v75, %v75
    %v78 = vmul.f32 %v76, %v76
    %v79 = vmul.f32 %v77, -39.69683
    %v80 = vmul.f32 %v78, -39.69683
    %v81 = vadd.f32 %v79, 220.9461
    %v82 = vadd.f32 %v80, 220.9461
    %v83 = vmul.f32 %v81, %v77
    %v84 = vmul.f32 %v82, %v78
    %v85 = vadd.f32 %v83, -275.9285
    %v86 = vadd.f32 %v84, -275.9285
    %v87 = vmul.f32 %v85, %v77
    %v88 = vmul.f32 %v86, %v78
    %v89 = vadd.f32 %v87, 138.35776
    %v90 = vadd.f32 %v88, 138.35776
    %v91 = vmul.f32 %v89, %v77
    %v92 = vmul.f32 %v90, %v78
    %v93 = vadd.f32 %v91, -30.664799
    %v94 = vadd.f32 %v92, -30.664799
    %v95 = vmul.f32 %v93, %v77
    %v96 = vmul.f32 %v94, %v78
    %v97 = vadd.f32 %v95, 2.5066283
    %v98 = vadd.f32 %v96, 2.5066283
    %v99 = vmul.f32 %v97, %v75
    %v100 = vmul.f32 %v98, %v76
    %v101 = vmul.f32 %v77, -54.476097
    %v102 = vmul.f32 %v78, -54.476097
    %v103 = vadd.f32 %v101, 161.58583
    %v104 = vadd.f32 %v102, 161.58583
    %v105 = vmul.f32 %v103, %v77
    %v106 = vmul.f32 %v104, %v78
    %v107 = vadd.f32 %v105, -155.69897
    %v108 = vadd.f32 %v106, -155.69897
    %v109 = vmul.f32 %v107, %v77
    %v110 = vmul.f32 %v108, %v78
    %v111 = vadd.f32 %v109, 66.801315
    %v112 = vadd.f32 %v110, 66.801315
    %v113 = vmul.f32 %v111, %v77
    %v114 = vmul.f32 %v112, %v78
    %v115 = vadd.f32 %v113, -13.280682
    %v116 = vadd.f32 %v114, -13.280682
    %v117 = vmul.f32 %v115, %v77
    %v118 = vmul.f32 %v116, %v78
    %v119 = vadd.f32 %v117, 1.0
    %v120 = vadd.f32 %v118, 1.0
    %v121 = vrcp.pop %v119
    %v122 = vmul.f32 1.0, %v121
    %v123 = vrcp.pop %v120
    %v124 = vmul.f32 1.0, %v123
    %v125 = vmul.f32 %v99, %v122
    %v126 = vmul.f32 %v100, %v124
    %v127 = vsub.f32 1.0, %v73
    %v128 = vsub.f32 1.0, %v74
    %v129 = vmin.f32 %v73, %v127
    %v130 = vmin.f32 %v74, %v128
    %v131 = vlog2.pop %v129
    %v132 = vmul.f32 %v131, 0.6931472
    %v133 = vlog2.pop %v130
    %v134 = vmul.f32 %v133, 0.6931472
    %v135 = vmul.f32 %v132, -2.0
    %v136 = vmul.f32 %v134, -2.0
    %v137 = vrsqrt.pop %v135
    %v138 = vmul.f32 %v135, %v137
    %vm139 = vcmp.eq.f32.partialorder %v135, inf
    %v140 = vsel %vm139, %v135, %v138
    %vm141 = vcmp.eq.f32.partialorder %v135, 0.0
    %v142 = vand.u32 %v135, 2147483648
    %v143 = vsel %vm141, %v142, %v140
    %v144 = vrsqrt.pop %v136
    %v145 = vmul.f32 %v136, %v144
    %vm146 = vcmp.eq.f32.partialorder %v136, inf
    %v147 = vsel %vm146, %v136, %v145
    %vm148 = vcmp.eq.f32.partialorder %v136, 0.0
    %v149 = vand.u32 %v136, 2147483648
    %v150 = vsel %vm148, %v149, %v147
    %v151 = vmul.f32 %v143, -0.007784894
    %v152 = vmul.f32 %v150, -0.007784894
    %v153 = vadd.f32 %v151, -0.32239646
    %v154 = vadd.f32 %v152, -0.32239646
    %v155 = vmul.f32 %v153, %v143
    %v156 = vmul.f32 %v154, %v150
    %v157 = vadd.f32 %v155, -2.4007583
    %v158 = vadd.f32 %v156, -2.4007583
    %v159 = vmul.f32 %v157, %v143
    %v160 = vmul.f32 %v158, %v150
    %v161 = vadd.f32 %v159, -2.5497324
    %v162 = vadd.f32 %v160, -2.5497324
    %v163 = vmul.f32 %v161, %v143
    %v164 = vmul.f32 %v162, %v150
    %v165 = vadd.f32 %v163, 4.3746643
    %v166 = vadd.f32 %v164, 4.3746643
    %v167 = vmul.f32 %v165, %v143
    %v168 = vmul.f32 %v166, %v150
    %v169 = vadd.f32 %v167, 2.938164
    %v170 = vadd.f32 %v168, 2.938164
    %v171 = vmul.f32 %v143, 0.007784696
    %v172 = vmul.f32 %v150, 0.007784696
    %v173 = vadd.f32 %v171, 0.32246712
    %v174 = vadd.f32 %v172, 0.32246712
    %v175 = vmul.f32 %v173, %v143
    %v176 = vmul.f32 %v174, %v150
    %v177 = vadd.f32 %v175, 2.4451342
    %v178 = vadd.f32 %v176, 2.4451342
    %v179 = vmul.f32 %v177, %v143
    %v180 = vmul.f32 %v178, %v150
    %v181 = vadd.f32 %v179, 3.7544086
    %v182 = vadd.f32 %v180, 3.7544086
    %v183 = vmul.f32 %v181, %v143
    %v184 = vmul.f32 %v182, %v150
    %v185 = vadd.f32 %v183, 1.0
    %v186 = vadd.f32 %v184, 1.0
    %v187 = vrcp.pop %v185
    %v188 = vmul.f32 1.0, %v187
    %v189 = vrcp.pop %v186
    %v190 = vmul.f32 1.0, %v189
    %v191 = vmul.f32 %v169, %v188
    %v192 = vmul.f32 %v170, %v190
    %vm193 = vcmp.gt.f32.partialorder %v73, 0.5
    %vm194 = vcmp.gt.f32.partialorder %v74, 0.5
    %v195 = vsub.f32 0.0, %v191
    %v196 = vsub.f32 0.0, %v192
    %v197 = vsel %vm193, %v195, %v191
    %v198 = vsel %vm194, %v196, %v192
    %v199 = vand.u32 2147483647, %v75
    %v200 = vand.u32 2147483647, %v76
    %vm201 = vcmp.le.f32.partialorder %v199, 0.47575
    %vm202 = vcmp.le.f32.partialorder %v200, 0.47575
    %v203 = vsel %vm201, %v125, %v197
    %v204 = vsel %vm202, %v126, %v198
    %v205 = vld [vmem:[#allocation4] sm:$0xff]
    %v206 = vld [vmem:[#allocation4 + $0x8] sm:$0xff]
    %v207 = vmul.f32 %v205, %v205
    %v208 = vmul.f32 %v206, %v206
    %v209 = vadd.f32 %v207, 1.0
    %v210 = vadd.f32 %v208, 1.0
    %v211 = vrsqrt.pop %v209
    %v212 = vmul.f32 %v209, %v211
    %vm213 = vcmp.eq.f32.partialorder %v209, inf
    %v214 = vsel %vm213, %v209, %v212
    %vm215 = vcmp.eq.f32.partialorder %v209, 0.0
    %v216 = vand.u32 %v209, 2147483648
    %v217 = vsel %vm215, %v216, %v214
    %v218 = vrsqrt.pop %v210
    %v219 = vmul.f32 %v210, %v218
    %vm220 = vcmp.eq.f32.partialorder %v210, inf
    %v221 = vsel %vm220, %v210, %v219
    %vm222 = vcmp.eq.f32.partialorder %v210, 0.0
    %v223 = vand.u32 %v210, 2147483648
    %v224 = vsel %vm222, %v223, %v221
    %v225 = vmul.f32 %v217, %v203
    %v226 = vmul.f32 %v224, %v204
    %v227 = vadd.f32 %v205, %v225
    %v228 = vadd.f32 %v206, %v226
    %229 = vst [vmem:[#allocation7] sm:$0xff] %v227
    %230 = vst [vmem:[#allocation7 + $0x8] sm:$0xff] %v228
    // Predicated region
    $region10: #{tpu_custom_call.1} parent=1 // pred_check
      _
    $region11: #{tpu_custom_call.1} parent=1 // pred_check_branch
      %232 = sbr.rel (0) target = $region13
    $region12: #{tpu_custom_call.1} parent=1 // pred_region
      %s234 = ssub.s32 256, 256
      %235 = vsyncadd [#allocation6], %s234
      %s236 = sshll.u32 [#allocation7], 4
      %s237 = int_to_ptr.vmem [resolvable:$true] %s236
      %242 = dma.vmem_to_hbm [thread:$0]  %s237, 256, %s2, [#allocation6], 128, 128, 8
    $region13: #{tpu_custom_call.1} parent=1 // pred_fallthru
      _
    // Predicated region
    $region14: #{tpu_custom_call.1} parent=1 // pred_check
      _
    $region15: #{tpu_custom_call.1} parent=1 // pred_check_branch
      %244 = sbr.rel (0) target = $region17
    $region16: #{tpu_custom_call.1} parent=1 // pred_region
      %245 = dma.done [#allocation6], 256
    $region17: #{tpu_custom_call.1} parent=1 // pred_fallthru
      _
    %246 = vsyncpa [#allocation5], 1
    %247 = vsyncpa [#allocation6], 1

</llo_original>
